<compile_context>
chip_gen: v7x
topology: tpu7x:2x2x1
jax: 0.10.0
libtpu: 0.0.40
codegen_flags: <defaults>
</compile_context>

<pallas_src>
import jax
import jax.numpy as jnp
from jax import lax
from jax.experimental import pallas as pl
from jax.experimental.pallas import tpu as pltpu


# --------------------------------------------------------------------------- #
# Kernel
# --------------------------------------------------------------------------- #
def net_kernel(tok_ref, table_ref, bias_ref, out_ref):
    """Fused folded-net forward for one batch tile.

    tok_ref:   (L, TN) int32  token ids, samples along lanes (lane-dense).
    table_ref: (L, V)  f32    folded per-position lookup table (VMEM resident).
    bias_ref:  (1, 1)  f32    folded scalar bias (SMEM).
    out_ref:   (1, TN) f32    lane-dense output row for this tile.
    """
    tok = tok_ref[...]                       # (L, TN) int32
    table = table_ref[...]                   # (L, V)  f32
    _, V = table.shape

    # Embedding lookup as a vocab-sized broadcast/compare/select sweep on the
    # VPU.  This avoids an in-kernel dynamic gather (limited Mosaic support)
    # while staying fully lane-dense; V=50 so the unrolled sweep is tiny.
    acc = jnp.zeros(tok.shape, jnp.float32)
    for v in range(V):
        acc = acc + jnp.where(tok == v, table[:, v:v + 1], 0.0)

    # Sum the L per-position contributions (sublane reduce) and add the bias.
    out_ref[...] = jnp.sum(acc, axis=0, keepdims=True) + bias_ref[0, 0]


# --------------------------------------------------------------------------- #
# Parameter folding (plain JAX, done once in the wrapper)
# --------------------------------------------------------------------------- #
def fold_net_params(params):
    """Collapse Embedding->Conv1d->Conv1d->Flatten->Linear into (table, bias).

    table[t, v] = contribution of token v at position t to the scalar output;
    bias is the accumulated bias of the whole affine stack.
    """
    emb, w1, b1, w2, b2, w3, b3 = params
    V, E = emb.shape                         # (50, 10)
    C1 = w1.shape[0]                         # 16
    C2 = w2.shape[0]                         # 8
    K = w1.shape[2]                          # 3
    L2 = w3.shape[1] // C2                   # 6  (Linear(48,1) => 48 = 8*6)
    L1 = L2 + (K - 1)                        # 8
    L = L1 + (K - 1)                         # 10

    # Linear weight re-indexed to (t2, c2): PyTorch flatten of (C2, L2) is c2*L2 + t2.
    w3r = jnp.transpose(w3.reshape(C2, L2), (1, 0))                  # (L2, C2)

    # d out / d y1[t1, c1]  (y1 = conv1 output in NCL layout)
    g1 = jnp.zeros((L1, C1), jnp.float32)
    for k in range(K):
        g1 = g1.at[k:k + L2].add(w3r @ w2[:, :, k])                  # (L2,C2)@(C2,C1)

    # d out / d x_emb[t, e]  (x_emb = embedded input, (L, E))
    w_eff = jnp.zeros((L, E), jnp.float32)
    for k in range(K):
        w_eff = w_eff.at[k:k + L1].add(g1 @ w1[:, :, k])             # (L1,C1)@(C1,E)

    bias_eff = b3[0] + jnp.sum(w3r * b2[None, :]) + jnp.sum(g1 * b1[None, :])
    table = w_eff @ emb.T                                            # (L, V)
    return table.astype(jnp.float32), bias_eff.astype(jnp.float32)


# --------------------------------------------------------------------------- #
# Wrapper
# --------------------------------------------------------------------------- #
def _round_up(x, m):
    return ((x + m - 1) // m) * m


def net_forward(token_ids, params, *, tile_n=1024):
    """Run the collapsed Net on int32 token ids of shape (N, L=10). Returns (N, 1)."""
    table, bias_eff = fold_net_params(params)
    L, V = table.shape
    N = token_ids.shape[0]
    assert token_ids.shape[1] == L, (token_ids.shape, L)

    # Batch tile: lane-dense (multiple of 128); 1024 keeps the (L, TN) int32
    # block + f32 accumulator comfortably inside the register file / VMEM on
    # all of v5e / v6e / v7x (token block is only 40 KiB, double-buffered).
    TN = _round_up(min(int(tile_n), _round_up(N, 128)), 128)
    N_pad = _round_up(N, TN)

    tok = token_ids.astype(jnp.int32)
    if N_pad != N:
        tok = jnp.pad(tok, ((0, N_pad - N), (0, 0)))     # pad rows discarded below
    tok_lt = tok.T                                       # (L, N_pad): samples on lanes

    out = pl.pallas_call(
        net_kernel,
        out_shape=jax.ShapeDtypeStruct((1, N_pad), jnp.float32),
        grid=(N_pad // TN,),
        in_specs=[
            pl.BlockSpec((L, TN), lambda i: (0, i)),             # token ids, batch-blocked
            pl.BlockSpec((L, V), lambda i: (0, 0)),              # folded table, resident
            pl.BlockSpec(memory_space=pltpu.MemorySpace.SMEM),   # scalar bias
        ],
        out_specs=pl.BlockSpec((1, TN), lambda i: (0, i)),       # lane-dense output row
        compiler_params=pltpu.CompilerParams(
            dimension_semantics=("parallel",),    # shard batch grid across v7x's 2 TCs
        ),
    )(tok_lt, table, bias_eff.reshape(1, 1))

    return out[0, :N].reshape(N, 1)


# --------------------------------------------------------------------------- #
# Pure-JAX reference (mirrors PyTorch NCL semantics, layer by layer)
# --------------------------------------------------------------------------- #
def ref_forward(token_ids, params):
    emb, w1, b1, w2, b2, w3, b3 = params
    x = jnp.take(emb, token_ids, axis=0)                      # (N, L, E)
    x = jnp.transpose(x, (0, 2, 1))                           # (N, E, L)  == NCL
    dn = ('NCH', 'OIH', 'NCH')
    y1 = lax.conv_general_dilated(x, w1, (1,), 'VALID',
                                  dimension_numbers=dn) + b1[None, :, None]
    y2 = lax.conv_general_dilated(y1, w2, (1,), 'VALID',
                                  dimension_numbers=dn) + b2[None, :, None]
    flat = y2.reshape(y2.shape[0], -1)                        # (N, 48)
    return flat @ w3.T + b3[None, :]                          # (N, 1)


def make_params(key):
    ks = jax.random.split(key, 7)
    emb = jax.random.normal(ks[0], (50, 10), jnp.float32) * 0.1
    w1 = jax.random.normal(ks[1], (16, 10, 3), jnp.float32) * 0.1
    b1 = jax.random.normal(ks[2], (16,), jnp.float32) * 0.1
    w2 = jax.random.normal(ks[3], (8, 16, 3), jnp.float32) * 0.1
    b2 = jax.random.normal(ks[4], (8,), jnp.float32) * 0.1
    w3 = jax.random.normal(ks[5], (1, 48), jnp.float32) * 0.1
    b3 = jax.random.normal(ks[6], (1,), jnp.float32) * 0.1
    return (emb, w1, b1, w2, b2, w3, b3)


if __name__ == "__main__":
    key = jax.random.PRNGKey(0)
    k_params, k_x, k_x2 = jax.random.split(key, 3)
    params = make_params(k_params)

    # Small input consistent with the module: batch=4, seq len 10, ids in [0,50).
    token_ids = jax.random.randint(k_x, (4, 10), 0, 50, dtype=jnp.int32)
    out = jax.block_until_ready(net_forward(token_ids, params))
    ref = ref_forward(token_ids, params)
    assert out.shape == (4, 1), out.shape
    assert jnp.allclose(out, ref, atol=1e-4, rtol=1e-4), (out, ref)

    # Exercise the batch grid (>1 step) and the padding path.
    token_ids2 = jax.random.randint(k_x2, (300, 10), 0, 50, dtype=jnp.int32)
    out2 = jax.block_until_ready(net_forward(token_ids2, params, tile_n=128))
    ref2 = ref_forward(token_ids2, params)
    assert out2.shape == (300, 1), out2.shape
    assert jnp.allclose(out2, ref2, atol=1e-4, rtol=1e-4)

    print("KERNEL_OK")
</pallas_src>

<mosaic_0001>
module attributes {stable_mosaic.version = 11 : i64} {
  func.func @net_kernel(%arg0: i32, %arg1: memref<10x128xi32, #tpu.memory_space<vmem>>, %arg2: memref<10x50xf32, #tpu.memory_space<vmem>>, %arg3: memref<1x1xf32, #tpu.memory_space<smem>>, %arg4: memref<1x128xf32, #tpu.memory_space<vmem>>) attributes {dimension_semantics = [#tpu.dimension_semantics<parallel>], iteration_bounds = array<i64: 1>, scalar_prefetch = 0 : i64, scratch_operands = 0 : i64, tpu.core_type = #tpu.core_type<tc>, window_params = [{transform_indices = @transform_0, window_bounds = array<i64: 10, 128>}, {pipeline_mode = #tpu.pipeline_mode<synchronous>, transform_indices = @transform_1, window_bounds = array<i64: 10, 50>}, {transform_indices = @transform_2, window_bounds = array<i64: 1, 1>}, {transform_indices = @transform_3, window_bounds = array<i64: 1, 128>}]} {
    %c0 = arith.constant 0 : index
    %c0_0 = arith.constant 0 : index
    %0 = vector.load %arg1[%c0, %c0_0] : memref<10x128xi32, #tpu.memory_space<vmem>>, vector<10x128xi32>
    %c0_1 = arith.constant 0 : index
    %c0_2 = arith.constant 0 : index
    %1 = vector.load %arg2[%c0_1, %c0_2] : memref<10x50xf32, #tpu.memory_space<vmem>>, vector<10x50xf32>
    %cst = arith.constant 0.000000e+00 : f32
    %2 = vector.broadcast %cst : f32 to vector<10x128xf32>
    %c0_i32 = arith.constant 0 : i32
    %3 = vector.broadcast %c0_i32 : i32 to vector<10x128xi32>
    %4 = arith.cmpi eq, %0, %3 : vector<10x128xi32>
    %5 = vector.extract_strided_slice %1 {offsets = [0, 0], sizes = [10, 1], strides = [1, 1]} : vector<10x50xf32> to vector<10x1xf32>
    %cst_3 = arith.constant 0.000000e+00 : f32
    %6 = vector.shape_cast %5 : vector<10x1xf32> to vector<10x1xf32>
    %7 = vector.broadcast %6 : vector<10x1xf32> to vector<10x128xf32>
    %8 = vector.broadcast %cst_3 : f32 to vector<10x128xf32>
    %9 = arith.select %4, %7, %8 : vector<10x128xi1>, vector<10x128xf32>
    %10 = arith.addf %2, %9 : vector<10x128xf32>
    %c1_i32 = arith.constant 1 : i32
    %11 = vector.broadcast %c1_i32 : i32 to vector<10x128xi32>
    %12 = arith.cmpi eq, %0, %11 : vector<10x128xi32>
    %13 = vector.extract_strided_slice %1 {offsets = [0, 1], sizes = [10, 1], strides = [1, 1]} : vector<10x50xf32> to vector<10x1xf32>
    %cst_4 = arith.constant 0.000000e+00 : f32
    %14 = vector.shape_cast %13 : vector<10x1xf32> to vector<10x1xf32>
    %15 = vector.broadcast %14 : vector<10x1xf32> to vector<10x128xf32>
    %16 = vector.broadcast %cst_4 : f32 to vector<10x128xf32>
    %17 = arith.select %12, %15, %16 : vector<10x128xi1>, vector<10x128xf32>
    %18 = arith.addf %10, %17 : vector<10x128xf32>
    %c2_i32 = arith.constant 2 : i32
    %19 = vector.broadcast %c2_i32 : i32 to vector<10x128xi32>
    %20 = arith.cmpi eq, %0, %19 : vector<10x128xi32>
    %21 = vector.extract_strided_slice %1 {offsets = [0, 2], sizes = [10, 1], strides = [1, 1]} : vector<10x50xf32> to vector<10x1xf32>
    %cst_5 = arith.constant 0.000000e+00 : f32
    %22 = vector.shape_cast %21 : vector<10x1xf32> to vector<10x1xf32>
    %23 = vector.broadcast %22 : vector<10x1xf32> to vector<10x128xf32>
    %24 = vector.broadcast %cst_5 : f32 to vector<10x128xf32>
    %25 = arith.select %20, %23, %24 : vector<10x128xi1>, vector<10x128xf32>
    %26 = arith.addf %18, %25 : vector<10x128xf32>
    %c3_i32 = arith.constant 3 : i32
    %27 = vector.broadcast %c3_i32 : i32 to vector<10x128xi32>
    %28 = arith.cmpi eq, %0, %27 : vector<10x128xi32>
    %29 = vector.extract_strided_slice %1 {offsets = [0, 3], sizes = [10, 1], strides = [1, 1]} : vector<10x50xf32> to vector<10x1xf32>
    %cst_6 = arith.constant 0.000000e+00 : f32
    %30 = vector.shape_cast %29 : vector<10x1xf32> to vector<10x1xf32>
    %31 = vector.broadcast %30 : vector<10x1xf32> to vector<10x128xf32>
    %32 = vector.broadcast %cst_6 : f32 to vector<10x128xf32>
    %33 = arith.select %28, %31, %32 : vector<10x128xi1>, vector<10x128xf32>
    %34 = arith.addf %26, %33 : vector<10x128xf32>
    %c4_i32 = arith.constant 4 : i32
    %35 = vector.broadcast %c4_i32 : i32 to vector<10x128xi32>
    %36 = arith.cmpi eq, %0, %35 : vector<10x128xi32>
    %37 = vector.extract_strided_slice %1 {offsets = [0, 4], sizes = [10, 1], strides = [1, 1]} : vector<10x50xf32> to vector<10x1xf32>
    %cst_7 = arith.constant 0.000000e+00 : f32
    %38 = vector.shape_cast %37 : vector<10x1xf32> to vector<10x1xf32>
    %39 = vector.broadcast %38 : vector<10x1xf32> to vector<10x128xf32>
    %40 = vector.broadcast %cst_7 : f32 to vector<10x128xf32>
    %41 = arith.select %36, %39, %40 : vector<10x128xi1>, vector<10x128xf32>
    %42 = arith.addf %34, %41 : vector<10x128xf32>
    %c5_i32 = arith.constant 5 : i32
    %43 = vector.broadcast %c5_i32 : i32 to vector<10x128xi32>
    %44 = arith.cmpi eq, %0, %43 : vector<10x128xi32>
    %45 = vector.extract_strided_slice %1 {offsets = [0, 5], sizes = [10, 1], strides = [1, 1]} : vector<10x50xf32> to vector<10x1xf32>
    %cst_8 = arith.constant 0.000000e+00 : f32
    %46 = vector.shape_cast %45 : vector<10x1xf32> to vector<10x1xf32>
    %47 = vector.broadcast %46 : vector<10x1xf32> to vector<10x128xf32>
    %48 = vector.broadcast %cst_8 : f32 to vector<10x128xf32>
    %49 = arith.select %44, %47, %48 : vector<10x128xi1>, vector<10x128xf32>
    %50 = arith.addf %42, %49 : vector<10x128xf32>
    %c6_i32 = arith.constant 6 : i32
    %51 = vector.broadcast %c6_i32 : i32 to vector<10x128xi32>
    %52 = arith.cmpi eq, %0, %51 : vector<10x128xi32>
    %53 = vector.extract_strided_slice %1 {offsets = [0, 6], sizes = [10, 1], strides = [1, 1]} : vector<10x50xf32> to vector<10x1xf32>
    %cst_9 = arith.constant 0.000000e+00 : f32
    %54 = vector.shape_cast %53 : vector<10x1xf32> to vector<10x1xf32>
    %55 = vector.broadcast %54 : vector<10x1xf32> to vector<10x128xf32>
    %56 = vector.broadcast %cst_9 : f32 to vector<10x128xf32>
    %57 = arith.select %52, %55, %56 : vector<10x128xi1>, vector<10x128xf32>
    %58 = arith.addf %50, %57 : vector<10x128xf32>
    %c7_i32 = arith.constant 7 : i32
    %59 = vector.broadcast %c7_i32 : i32 to vector<10x128xi32>
    %60 = arith.cmpi eq, %0, %59 : vector<10x128xi32>
    %61 = vector.extract_strided_slice %1 {offsets = [0, 7], sizes = [10, 1], strides = [1, 1]} : vector<10x50xf32> to vector<10x1xf32>
    %cst_10 = arith.constant 0.000000e+00 : f32
    %62 = vector.shape_cast %61 : vector<10x1xf32> to vector<10x1xf32>
    %63 = vector.broadcast %62 : vector<10x1xf32> to vector<10x128xf32>
    %64 = vector.broadcast %cst_10 : f32 to vector<10x128xf32>
    %65 = arith.select %60, %63, %64 : vector<10x128xi1>, vector<10x128xf32>
    %66 = arith.addf %58, %65 : vector<10x128xf32>
    %c8_i32 = arith.constant 8 : i32
    %67 = vector.broadcast %c8_i32 : i32 to vector<10x128xi32>
    %68 = arith.cmpi eq, %0, %67 : vector<10x128xi32>
    %69 = vector.extract_strided_slice %1 {offsets = [0, 8], sizes = [10, 1], strides = [1, 1]} : vector<10x50xf32> to vector<10x1xf32>
    %cst_11 = arith.constant 0.000000e+00 : f32
    %70 = vector.shape_cast %69 : vector<10x1xf32> to vector<10x1xf32>
    %71 = vector.broadcast %70 : vector<10x1xf32> to vector<10x128xf32>
    %72 = vector.broadcast %cst_11 : f32 to vector<10x128xf32>
    %73 = arith.select %68, %71, %72 : vector<10x128xi1>, vector<10x128xf32>
    %74 = arith.addf %66, %73 : vector<10x128xf32>
    %c9_i32 = arith.constant 9 : i32
    %75 = vector.broadcast %c9_i32 : i32 to vector<10x128xi32>
    %76 = arith.cmpi eq, %0, %75 : vector<10x128xi32>
    %77 = vector.extract_strided_slice %1 {offsets = [0, 9], sizes = [10, 1], strides = [1, 1]} : vector<10x50xf32> to vector<10x1xf32>
    %cst_12 = arith.constant 0.000000e+00 : f32
    %78 = vector.shape_cast %77 : vector<10x1xf32> to vector<10x1xf32>
    %79 = vector.broadcast %78 : vector<10x1xf32> to vector<10x128xf32>
    %80 = vector.broadcast %cst_12 : f32 to vector<10x128xf32>
    %81 = arith.select %76, %79, %80 : vector<10x128xi1>, vector<10x128xf32>
    %82 = arith.addf %74, %81 : vector<10x128xf32>
    %c10_i32 = arith.constant 10 : i32
    %83 = vector.broadcast %c10_i32 : i32 to vector<10x128xi32>
    %84 = arith.cmpi eq, %0, %83 : vector<10x128xi32>
    %85 = vector.extract_strided_slice %1 {offsets = [0, 10], sizes = [10, 1], strides = [1, 1]} : vector<10x50xf32> to vector<10x1xf32>
    %cst_13 = arith.constant 0.000000e+00 : f32
    %86 = vector.shape_cast %85 : vector<10x1xf32> to vector<10x1xf32>
    %87 = vector.broadcast %86 : vector<10x1xf32> to vector<10x128xf32>
    %88 = vector.broadcast %cst_13 : f32 to vector<10x128xf32>
    %89 = arith.select %84, %87, %88 : vector<10x128xi1>, vector<10x128xf32>
    %90 = arith.addf %82, %89 : vector<10x128xf32>
    %c11_i32 = arith.constant 11 : i32
    %91 = vector.broadcast %c11_i32 : i32 to vector<10x128xi32>
    %92 = arith.cmpi eq, %0, %91 : vector<10x128xi32>
    %93 = vector.extract_strided_slice %1 {offsets = [0, 11], sizes = [10, 1], strides = [1, 1]} : vector<10x50xf32> to vector<10x1xf32>
    %cst_14 = arith.constant 0.000000e+00 : f32
    %94 = vector.shape_cast %93 : vector<10x1xf32> to vector<10x1xf32>
    %95 = vector.broadcast %94 : vector<10x1xf32> to vector<10x128xf32>
    %96 = vector.broadcast %cst_14 : f32 to vector<10x128xf32>
    %97 = arith.select %92, %95, %96 : vector<10x128xi1>, vector<10x128xf32>
    %98 = arith.addf %90, %97 : vector<10x128xf32>
    %c12_i32 = arith.constant 12 : i32
    %99 = vector.broadcast %c12_i32 : i32 to vector<10x128xi32>
    %100 = arith.cmpi eq, %0, %99 : vector<10x128xi32>
    %101 = vector.extract_strided_slice %1 {offsets = [0, 12], sizes = [10, 1], strides = [1, 1]} : vector<10x50xf32> to vector<10x1xf32>
    %cst_15 = arith.constant 0.000000e+00 : f32
    %102 = vector.shape_cast %101 : vector<10x1xf32> to vector<10x1xf32>
    %103 = vector.broadcast %102 : vector<10x1xf32> to vector<10x128xf32>
    %104 = vector.broadcast %cst_15 : f32 to vector<10x128xf32>
    %105 = arith.select %100, %103, %104 : vector<10x128xi1>, vector<10x128xf32>
    %106 = arith.addf %98, %105 : vector<10x128xf32>
    %c13_i32 = arith.constant 13 : i32
    %107 = vector.broadcast %c13_i32 : i32 to vector<10x128xi32>
    %108 = arith.cmpi eq, %0, %107 : vector<10x128xi32>
    %109 = vector.extract_strided_slice %1 {offsets = [0, 13], sizes = [10, 1], strides = [1, 1]} : vector<10x50xf32> to vector<10x1xf32>
    %cst_16 = arith.constant 0.000000e+00 : f32
    %110 = vector.shape_cast %109 : vector<10x1xf32> to vector<10x1xf32>
    %111 = vector.broadcast %110 : vector<10x1xf32> to vector<10x128xf32>
    %112 = vector.broadcast %cst_16 : f32 to vector<10x128xf32>
    %113 = arith.select %108, %111, %112 : vector<10x128xi1>, vector<10x128xf32>
    %114 = arith.addf %106, %113 : vector<10x128xf32>
    %c14_i32 = arith.constant 14 : i32
    %115 = vector.broadcast %c14_i32 : i32 to vector<10x128xi32>
    %116 = arith.cmpi eq, %0, %115 : vector<10x128xi32>
    %117 = vector.extract_strided_slice %1 {offsets = [0, 14], sizes = [10, 1], strides = [1, 1]} : vector<10x50xf32> to vector<10x1xf32>
    %cst_17 = arith.constant 0.000000e+00 : f32
    %118 = vector.shape_cast %117 : vector<10x1xf32> to vector<10x1xf32>
    %119 = vector.broadcast %118 : vector<10x1xf32> to vector<10x128xf32>
    %120 = vector.broadcast %cst_17 : f32 to vector<10x128xf32>
    %121 = arith.select %116, %119, %120 : vector<10x128xi1>, vector<10x128xf32>
    %122 = arith.addf %114, %121 : vector<10x128xf32>
    %c15_i32 = arith.constant 15 : i32
    %123 = vector.broadcast %c15_i32 : i32 to vector<10x128xi32>
    %124 = arith.cmpi eq, %0, %123 : vector<10x128xi32>
    %125 = vector.extract_strided_slice %1 {offsets = [0, 15], sizes = [10, 1], strides = [1, 1]} : vector<10x50xf32> to vector<10x1xf32>
    %cst_18 = arith.constant 0.000000e+00 : f32
    %126 = vector.shape_cast %125 : vector<10x1xf32> to vector<10x1xf32>
    %127 = vector.broadcast %126 : vector<10x1xf32> to vector<10x128xf32>
    %128 = vector.broadcast %cst_18 : f32 to vector<10x128xf32>
    %129 = arith.select %124, %127, %128 : vector<10x128xi1>, vector<10x128xf32>
    %130 = arith.addf %122, %129 : vector<10x128xf32>
    %c16_i32 = arith.constant 16 : i32
    %131 = vector.broadcast %c16_i32 : i32 to vector<10x128xi32>
    %132 = arith.cmpi eq, %0, %131 : vector<10x128xi32>
    %133 = vector.extract_strided_slice %1 {offsets = [0, 16], sizes = [10, 1], strides = [1, 1]} : vector<10x50xf32> to vector<10x1xf32>
    %cst_19 = arith.constant 0.000000e+00 : f32
    %134 = vector.shape_cast %133 : vector<10x1xf32> to vector<10x1xf32>
    %135 = vector.broadcast %134 : vector<10x1xf32> to vector<10x128xf32>
    %136 = vector.broadcast %cst_19 : f32 to vector<10x128xf32>
    %137 = arith.select %132, %135, %136 : vector<10x128xi1>, vector<10x128xf32>
    %138 = arith.addf %130, %137 : vector<10x128xf32>
    %c17_i32 = arith.constant 17 : i32
    %139 = vector.broadcast %c17_i32 : i32 to vector<10x128xi32>
    %140 = arith.cmpi eq, %0, %139 : vector<10x128xi32>
    %141 = vector.extract_strided_slice %1 {offsets = [0, 17], sizes = [10, 1], strides = [1, 1]} : vector<10x50xf32> to vector<10x1xf32>
    %cst_20 = arith.constant 0.000000e+00 : f32
    %142 = vector.shape_cast %141 : vector<10x1xf32> to vector<10x1xf32>
    %143 = vector.broadcast %142 : vector<10x1xf32> to vector<10x128xf32>
    %144 = vector.broadcast %cst_20 : f32 to vector<10x128xf32>
    %145 = arith.select %140, %143, %144 : vector<10x128xi1>, vector<10x128xf32>
    %146 = arith.addf %138, %145 : vector<10x128xf32>
    %c18_i32 = arith.constant 18 : i32
    %147 = vector.broadcast %c18_i32 : i32 to vector<10x128xi32>
    %148 = arith.cmpi eq, %0, %147 : vector<10x128xi32>
    %149 = vector.extract_strided_slice %1 {offsets = [0, 18], sizes = [10, 1], strides = [1, 1]} : vector<10x50xf32> to vector<10x1xf32>
    %cst_21 = arith.constant 0.000000e+00 : f32
    %150 = vector.shape_cast %149 : vector<10x1xf32> to vector<10x1xf32>
    %151 = vector.broadcast %150 : vector<10x1xf32> to vector<10x128xf32>
    %152 = vector.broadcast %cst_21 : f32 to vector<10x128xf32>
    %153 = arith.select %148, %151, %152 : vector<10x128xi1>, vector<10x128xf32>
    %154 = arith.addf %146, %153 : vector<10x128xf32>
    %c19_i32 = arith.constant 19 : i32
    %155 = vector.broadcast %c19_i32 : i32 to vector<10x128xi32>
    %156 = arith.cmpi eq, %0, %155 : vector<10x128xi32>
    %157 = vector.extract_strided_slice %1 {offsets = [0, 19], sizes = [10, 1], strides = [1, 1]} : vector<10x50xf32> to vector<10x1xf32>
    %cst_22 = arith.constant 0.000000e+00 : f32
    %158 = vector.shape_cast %157 : vector<10x1xf32> to vector<10x1xf32>
    %159 = vector.broadcast %158 : vector<10x1xf32> to vector<10x128xf32>
    %160 = vector.broadcast %cst_22 : f32 to vector<10x128xf32>
    %161 = arith.select %156, %159, %160 : vector<10x128xi1>, vector<10x128xf32>
    %162 = arith.addf %154, %161 : vector<10x128xf32>
    %c20_i32 = arith.constant 20 : i32
    %163 = vector.broadcast %c20_i32 : i32 to vector<10x128xi32>
    %164 = arith.cmpi eq, %0, %163 : vector<10x128xi32>
    %165 = vector.extract_strided_slice %1 {offsets = [0, 20], sizes = [10, 1], strides = [1, 1]} : vector<10x50xf32> to vector<10x1xf32>
    %cst_23 = arith.constant 0.000000e+00 : f32
    %166 = vector.shape_cast %165 : vector<10x1xf32> to vector<10x1xf32>
    %167 = vector.broadcast %166 : vector<10x1xf32> to vector<10x128xf32>
    %168 = vector.broadcast %cst_23 : f32 to vector<10x128xf32>
    %169 = arith.select %164, %167, %168 : vector<10x128xi1>, vector<10x128xf32>
    %170 = arith.addf %162, %169 : vector<10x128xf32>
    %c21_i32 = arith.constant 21 : i32
    %171 = vector.broadcast %c21_i32 : i32 to vector<10x128xi32>
    %172 = arith.cmpi eq, %0, %171 : vector<10x128xi32>
    %173 = vector.extract_strided_slice %1 {offsets = [0, 21], sizes = [10, 1], strides = [1, 1]} : vector<10x50xf32> to vector<10x1xf32>
    %cst_24 = arith.constant 0.000000e+00 : f32
    %174 = vector.shape_cast %173 : vector<10x1xf32> to vector<10x1xf32>
    %175 = vector.broadcast %174 : vector<10x1xf32> to vector<10x128xf32>
    %176 = vector.broadcast %cst_24 : f32 to vector<10x128xf32>
    %177 = arith.select %172, %175, %176 : vector<10x128xi1>, vector<10x128xf32>
    %178 = arith.addf %170, %177 : vector<10x128xf32>
    %c22_i32 = arith.constant 22 : i32
    %179 = vector.broadcast %c22_i32 : i32 to vector<10x128xi32>
    %180 = arith.cmpi eq, %0, %179 : vector<10x128xi32>
    %181 = vector.extract_strided_slice %1 {offsets = [0, 22], sizes = [10, 1], strides = [1, 1]} : vector<10x50xf32> to vector<10x1xf32>
    %cst_25 = arith.constant 0.000000e+00 : f32
    %182 = vector.shape_cast %181 : vector<10x1xf32> to vector<10x1xf32>
    %183 = vector.broadcast %182 : vector<10x1xf32> to vector<10x128xf32>
    %184 = vector.broadcast %cst_25 : f32 to vector<10x128xf32>
    %185 = arith.select %180, %183, %184 : vector<10x128xi1>, vector<10x128xf32>
    %186 = arith.addf %178, %185 : vector<10x128xf32>
    %c23_i32 = arith.constant 23 : i32
    %187 = vector.broadcast %c23_i32 : i32 to vector<10x128xi32>
    %188 = arith.cmpi eq, %0, %187 : vector<10x128xi32>
    %189 = vector.extract_strided_slice %1 {offsets = [0, 23], sizes = [10, 1], strides = [1, 1]} : vector<10x50xf32> to vector<10x1xf32>
    %cst_26 = arith.constant 0.000000e+00 : f32
    %190 = vector.shape_cast %189 : vector<10x1xf32> to vector<10x1xf32>
    %191 = vector.broadcast %190 : vector<10x1xf32> to vector<10x128xf32>
    %192 = vector.broadcast %cst_26 : f32 to vector<10x128xf32>
    %193 = arith.select %188, %191, %192 : vector<10x128xi1>, vector<10x128xf32>
    %194 = arith.addf %186, %193 : vector<10x128xf32>
    %c24_i32 = arith.constant 24 : i32
    %195 = vector.broadcast %c24_i32 : i32 to vector<10x128xi32>
    %196 = arith.cmpi eq, %0, %195 : vector<10x128xi32>
    %197 = vector.extract_strided_slice %1 {offsets = [0, 24], sizes = [10, 1], strides = [1, 1]} : vector<10x50xf32> to vector<10x1xf32>
    %cst_27 = arith.constant 0.000000e+00 : f32
    %198 = vector.shape_cast %197 : vector<10x1xf32> to vector<10x1xf32>
    %199 = vector.broadcast %198 : vector<10x1xf32> to vector<10x128xf32>
    %200 = vector.broadcast %cst_27 : f32 to vector<10x128xf32>
    %201 = arith.select %196, %199, %200 : vector<10x128xi1>, vector<10x128xf32>
    %202 = arith.addf %194, %201 : vector<10x128xf32>
    %c25_i32 = arith.constant 25 : i32
    %203 = vector.broadcast %c25_i32 : i32 to vector<10x128xi32>
    %204 = arith.cmpi eq, %0, %203 : vector<10x128xi32>
    %205 = vector.extract_strided_slice %1 {offsets = [0, 25], sizes = [10, 1], strides = [1, 1]} : vector<10x50xf32> to vector<10x1xf32>
    %cst_28 = arith.constant 0.000000e+00 : f32
    %206 = vector.shape_cast %205 : vector<10x1xf32> to vector<10x1xf32>
    %207 = vector.broadcast %206 : vector<10x1xf32> to vector<10x128xf32>
    %208 = vector.broadcast %cst_28 : f32 to vector<10x128xf32>
    %209 = arith.select %204, %207, %208 : vector<10x128xi1>, vector<10x128xf32>
    %210 = arith.addf %202, %209 : vector<10x128xf32>
    %c26_i32 = arith.constant 26 : i32
    %211 = vector.broadcast %c26_i32 : i32 to vector<10x128xi32>
    %212 = arith.cmpi eq, %0, %211 : vector<10x128xi32>
    %213 = vector.extract_strided_slice %1 {offsets = [0, 26], sizes = [10, 1], strides = [1, 1]} : vector<10x50xf32> to vector<10x1xf32>
    %cst_29 = arith.constant 0.000000e+00 : f32
    %214 = vector.shape_cast %213 : vector<10x1xf32> to vector<10x1xf32>
    %215 = vector.broadcast %214 : vector<10x1xf32> to vector<10x128xf32>
    %216 = vector.broadcast %cst_29 : f32 to vector<10x128xf32>
    %217 = arith.select %212, %215, %216 : vector<10x128xi1>, vector<10x128xf32>
    %218 = arith.addf %210, %217 : vector<10x128xf32>
    %c27_i32 = arith.constant 27 : i32
    %219 = vector.broadcast %c27_i32 : i32 to vector<10x128xi32>
    %220 = arith.cmpi eq, %0, %219 : vector<10x128xi32>
    %221 = vector.extract_strided_slice %1 {offsets = [0, 27], sizes = [10, 1], strides = [1, 1]} : vector<10x50xf32> to vector<10x1xf32>
    %cst_30 = arith.constant 0.000000e+00 : f32
    %222 = vector.shape_cast %221 : vector<10x1xf32> to vector<10x1xf32>
    %223 = vector.broadcast %222 : vector<10x1xf32> to vector<10x128xf32>
    %224 = vector.broadcast %cst_30 : f32 to vector<10x128xf32>
    %225 = arith.select %220, %223, %224 : vector<10x128xi1>, vector<10x128xf32>
    %226 = arith.addf %218, %225 : vector<10x128xf32>
    %c28_i32 = arith.constant 28 : i32
    %227 = vector.broadcast %c28_i32 : i32 to vector<10x128xi32>
    %228 = arith.cmpi eq, %0, %227 : vector<10x128xi32>
    %229 = vector.extract_strided_slice %1 {offsets = [0, 28], sizes = [10, 1], strides = [1, 1]} : vector<10x50xf32> to vector<10x1xf32>
    %cst_31 = arith.constant 0.000000e+00 : f32
    %230 = vector.shape_cast %229 : vector<10x1xf32> to vector<10x1xf32>
    %231 = vector.broadcast %230 : vector<10x1xf32> to vector<10x128xf32>
    %232 = vector.broadcast %cst_31 : f32 to vector<10x128xf32>
    %233 = arith.select %228, %231, %232 : vector<10x128xi1>, vector<10x128xf32>
    %234 = arith.addf %226, %233 : vector<10x128xf32>
    %c29_i32 = arith.constant 29 : i32
    %235 = vector.broadcast %c29_i32 : i32 to vector<10x128xi32>
    %236 = arith.cmpi eq, %0, %235 : vector<10x128xi32>
    %237 = vector.extract_strided_slice %1 {offsets = [0, 29], sizes = [10, 1], strides = [1, 1]} : vector<10x50xf32> to vector<10x1xf32>
    %cst_32 = arith.constant 0.000000e+00 : f32
    %238 = vector.shape_cast %237 : vector<10x1xf32> to vector<10x1xf32>
    %239 = vector.broadcast %238 : vector<10x1xf32> to vector<10x128xf32>
    %240 = vector.broadcast %cst_32 : f32 to vector<10x128xf32>
    %241 = arith.select %236, %239, %240 : vector<10x128xi1>, vector<10x128xf32>
    %242 = arith.addf %234, %241 : vector<10x128xf32>
    %c30_i32 = arith.constant 30 : i32
    %243 = vector.broadcast %c30_i32 : i32 to vector<10x128xi32>
    %244 = arith.cmpi eq, %0, %243 : vector<10x128xi32>
    %245 = vector.extract_strided_slice %1 {offsets = [0, 30], sizes = [10, 1], strides = [1, 1]} : vector<10x50xf32> to vector<10x1xf32>
    %cst_33 = arith.constant 0.000000e+00 : f32
    %246 = vector.shape_cast %245 : vector<10x1xf32> to vector<10x1xf32>
    %247 = vector.broadcast %246 : vector<10x1xf32> to vector<10x128xf32>
    %248 = vector.broadcast %cst_33 : f32 to vector<10x128xf32>
    %249 = arith.select %244, %247, %248 : vector<10x128xi1>, vector<10x128xf32>
    %250 = arith.addf %242, %249 : vector<10x128xf32>
    %c31_i32 = arith.constant 31 : i32
    %251 = vector.broadcast %c31_i32 : i32 to vector<10x128xi32>
    %252 = arith.cmpi eq, %0, %251 : vector<10x128xi32>
    %253 = vector.extract_strided_slice %1 {offsets = [0, 31], sizes = [10, 1], strides = [1, 1]} : vector<10x50xf32> to vector<10x1xf32>
    %cst_34 = arith.constant 0.000000e+00 : f32
    %254 = vector.shape_cast %253 : vector<10x1xf32> to vector<10x1xf32>
    %255 = vector.broadcast %254 : vector<10x1xf32> to vector<10x128xf32>
    %256 = vector.broadcast %cst_34 : f32 to vector<10x128xf32>
    %257 = arith.select %252, %255, %256 : vector<10x128xi1>, vector<10x128xf32>
    %258 = arith.addf %250, %257 : vector<10x128xf32>
    %c32_i32 = arith.constant 32 : i32
    %259 = vector.broadcast %c32_i32 : i32 to vector<10x128xi32>
    %260 = arith.cmpi eq, %0, %259 : vector<10x128xi32>
    %261 = vector.extract_strided_slice %1 {offsets = [0, 32], sizes = [10, 1], strides = [1, 1]} : vector<10x50xf32> to vector<10x1xf32>
    %cst_35 = arith.constant 0.000000e+00 : f32
    %262 = vector.shape_cast %261 : vector<10x1xf32> to vector<10x1xf32>
    %263 = vector.broadcast %262 : vector<10x1xf32> to vector<10x128xf32>
    %264 = vector.broadcast %cst_35 : f32 to vector<10x128xf32>
    %265 = arith.select %260, %263, %264 : vector<10x128xi1>, vector<10x128xf32>
    %266 = arith.addf %258, %265 : vector<10x128xf32>
    %c33_i32 = arith.constant 33 : i32
    %267 = vector.broadcast %c33_i32 : i32 to vector<10x128xi32>
    %268 = arith.cmpi eq, %0, %267 : vector<10x128xi32>
    %269 = vector.extract_strided_slice %1 {offsets = [0, 33], sizes = [10, 1], strides = [1, 1]} : vector<10x50xf32> to vector<10x1xf32>
    %cst_36 = arith.constant 0.000000e+00 : f32
    %270 = vector.shape_cast %269 : vector<10x1xf32> to vector<10x1xf32>
    %271 = vector.broadcast %270 : vector<10x1xf32> to vector<10x128xf32>
    %272 = vector.broadcast %cst_36 : f32 to vector<10x128xf32>
    %273 = arith.select %268, %271, %272 : vector<10x128xi1>, vector<10x128xf32>
    %274 = arith.addf %266, %273 : vector<10x128xf32>
    %c34_i32 = arith.constant 34 : i32
    %275 = vector.broadcast %c34_i32 : i32 to vector<10x128xi32>
    %276 = arith.cmpi eq, %0, %275 : vector<10x128xi32>
    %277 = vector.extract_strided_slice %1 {offsets = [0, 34], sizes = [10, 1], strides = [1, 1]} : vector<10x50xf32> to vector<10x1xf32>
    %cst_37 = arith.constant 0.000000e+00 : f32
    %278 = vector.shape_cast %277 : vector<10x1xf32> to vector<10x1xf32>
    %279 = vector.broadcast %278 : vector<10x1xf32> to vector<10x128xf32>
    %280 = vector.broadcast %cst_37 : f32 to vector<10x128xf32>
    %281 = arith.select %276, %279, %280 : vector<10x128xi1>, vector<10x128xf32>
    %282 = arith.addf %274, %281 : vector<10x128xf32>
    %c35_i32 = arith.constant 35 : i32
    %283 = vector.broadcast %c35_i32 : i32 to vector<10x128xi32>
    %284 = arith.cmpi eq, %0, %283 : vector<10x128xi32>
    %285 = vector.extract_strided_slice %1 {offsets = [0, 35], sizes = [10, 1], strides = [1, 1]} : vector<10x50xf32> to vector<10x1xf32>
    %cst_38 = arith.constant 0.000000e+00 : f32
    %286 = vector.shape_cast %285 : vector<10x1xf32> to vector<10x1xf32>
    %287 = vector.broadcast %286 : vector<10x1xf32> to vector<10x128xf32>
    %288 = vector.broadcast %cst_38 : f32 to vector<10x128xf32>
    %289 = arith.select %284, %287, %288 : vector<10x128xi1>, vector<10x128xf32>
    %290 = arith.addf %282, %289 : vector<10x128xf32>
    %c36_i32 = arith.constant 36 : i32
    %291 = vector.broadcast %c36_i32 : i32 to vector<10x128xi32>
    %292 = arith.cmpi eq, %0, %291 : vector<10x128xi32>
    %293 = vector.extract_strided_slice %1 {offsets = [0, 36], sizes = [10, 1], strides = [1, 1]} : vector<10x50xf32> to vector<10x1xf32>
    %cst_39 = arith.constant 0.000000e+00 : f32
    %294 = vector.shape_cast %293 : vector<10x1xf32> to vector<10x1xf32>
    %295 = vector.broadcast %294 : vector<10x1xf32> to vector<10x128xf32>
    %296 = vector.broadcast %cst_39 : f32 to vector<10x128xf32>
    %297 = arith.select %292, %295, %296 : vector<10x128xi1>, vector<10x128xf32>
    %298 = arith.addf %290, %297 : vector<10x128xf32>
    %c37_i32 = arith.constant 37 : i32
    %299 = vector.broadcast %c37_i32 : i32 to vector<10x128xi32>
    %300 = arith.cmpi eq, %0, %299 : vector<10x128xi32>
    %301 = vector.extract_strided_slice %1 {offsets = [0, 37], sizes = [10, 1], strides = [1, 1]} : vector<10x50xf32> to vector<10x1xf32>
    %cst_40 = arith.constant 0.000000e+00 : f32
    %302 = vector.shape_cast %301 : vector<10x1xf32> to vector<10x1xf32>
    %303 = vector.broadcast %302 : vector<10x1xf32> to vector<10x128xf32>
    %304 = vector.broadcast %cst_40 : f32 to vector<10x128xf32>
    %305 = arith.select %300, %303, %304 : vector<10x128xi1>, vector<10x128xf32>
    %306 = arith.addf %298, %305 : vector<10x128xf32>
    %c38_i32 = arith.constant 38 : i32
    %307 = vector.broadcast %c38_i32 : i32 to vector<10x128xi32>
    %308 = arith.cmpi eq, %0, %307 : vector<10x128xi32>
    %309 = vector.extract_strided_slice %1 {offsets = [0, 38], sizes = [10, 1], strides = [1, 1]} : vector<10x50xf32> to vector<10x1xf32>
    %cst_41 = arith.constant 0.000000e+00 : f32
    %310 = vector.shape_cast %309 : vector<10x1xf32> to vector<10x1xf32>
    %311 = vector.broadcast %310 : vector<10x1xf32> to vector<10x128xf32>
    %312 = vector.broadcast %cst_41 : f32 to vector<10x128xf32>
    %313 = arith.select %308, %311, %312 : vector<10x128xi1>, vector<10x128xf32>
    %314 = arith.addf %306, %313 : vector<10x128xf32>
    %c39_i32 = arith.constant 39 : i32
    %315 = vector.broadcast %c39_i32 : i32 to vector<10x128xi32>
    %316 = arith.cmpi eq, %0, %315 : vector<10x128xi32>
    %317 = vector.extract_strided_slice %1 {offsets = [0, 39], sizes = [10, 1], strides = [1, 1]} : vector<10x50xf32> to vector<10x1xf32>
    %cst_42 = arith.constant 0.000000e+00 : f32
    %318 = vector.shape_cast %317 : vector<10x1xf32> to vector<10x1xf32>
    %319 = vector.broadcast %318 : vector<10x1xf32> to vector<10x128xf32>
    %320 = vector.broadcast %cst_42 : f32 to vector<10x128xf32>
    %321 = arith.select %316, %319, %320 : vector<10x128xi1>, vector<10x128xf32>
    %322 = arith.addf %314, %321 : vector<10x128xf32>
    %c40_i32 = arith.constant 40 : i32
    %323 = vector.broadcast %c40_i32 : i32 to vector<10x128xi32>
    %324 = arith.cmpi eq, %0, %323 : vector<10x128xi32>
    %325 = vector.extract_strided_slice %1 {offsets = [0, 40], sizes = [10, 1], strides = [1, 1]} : vector<10x50xf32> to vector<10x1xf32>
    %cst_43 = arith.constant 0.000000e+00 : f32
    %326 = vector.shape_cast %325 : vector<10x1xf32> to vector<10x1xf32>
    %327 = vector.broadcast %326 : vector<10x1xf32> to vector<10x128xf32>
    %328 = vector.broadcast %cst_43 : f32 to vector<10x128xf32>
    %329 = arith.select %324, %327, %328 : vector<10x128xi1>, vector<10x128xf32>
    %330 = arith.addf %322, %329 : vector<10x128xf32>
    %c41_i32 = arith.constant 41 : i32
    %331 = vector.broadcast %c41_i32 : i32 to vector<10x128xi32>
    %332 = arith.cmpi eq, %0, %331 : vector<10x128xi32>
    %333 = vector.extract_strided_slice %1 {offsets = [0, 41], sizes = [10, 1], strides = [1, 1]} : vector<10x50xf32> to vector<10x1xf32>
    %cst_44 = arith.constant 0.000000e+00 : f32
    %334 = vector.shape_cast %333 : vector<10x1xf32> to vector<10x1xf32>
    %335 = vector.broadcast %334 : vector<10x1xf32> to vector<10x128xf32>
    %336 = vector.broadcast %cst_44 : f32 to vector<10x128xf32>
    %337 = arith.select %332, %335, %336 : vector<10x128xi1>, vector<10x128xf32>
    %338 = arith.addf %330, %337 : vector<10x128xf32>
    %c42_i32 = arith.constant 42 : i32
    %339 = vector.broadcast %c42_i32 : i32 to vector<10x128xi32>
    %340 = arith.cmpi eq, %0, %339 : vector<10x128xi32>
    %341 = vector.extract_strided_slice %1 {offsets = [0, 42], sizes = [10, 1], strides = [1, 1]} : vector<10x50xf32> to vector<10x1xf32>
    %cst_45 = arith.constant 0.000000e+00 : f32
    %342 = vector.shape_cast %341 : vector<10x1xf32> to vector<10x1xf32>
    %343 = vector.broadcast %342 : vector<10x1xf32> to vector<10x128xf32>
    %344 = vector.broadcast %cst_45 : f32 to vector<10x128xf32>
    %345 = arith.select %340, %343, %344 : vector<10x128xi1>, vector<10x128xf32>
    %346 = arith.addf %338, %345 : vector<10x128xf32>
    %c43_i32 = arith.constant 43 : i32
    %347 = vector.broadcast %c43_i32 : i32 to vector<10x128xi32>
    %348 = arith.cmpi eq, %0, %347 : vector<10x128xi32>
    %349 = vector.extract_strided_slice %1 {offsets = [0, 43], sizes = [10, 1], strides = [1, 1]} : vector<10x50xf32> to vector<10x1xf32>
    %cst_46 = arith.constant 0.000000e+00 : f32
    %350 = vector.shape_cast %349 : vector<10x1xf32> to vector<10x1xf32>
    %351 = vector.broadcast %350 : vector<10x1xf32> to vector<10x128xf32>
    %352 = vector.broadcast %cst_46 : f32 to vector<10x128xf32>
    %353 = arith.select %348, %351, %352 : vector<10x128xi1>, vector<10x128xf32>
    %354 = arith.addf %346, %353 : vector<10x128xf32>
    %c44_i32 = arith.constant 44 : i32
    %355 = vector.broadcast %c44_i32 : i32 to vector<10x128xi32>
    %356 = arith.cmpi eq, %0, %355 : vector<10x128xi32>
    %357 = vector.extract_strided_slice %1 {offsets = [0, 44], sizes = [10, 1], strides = [1, 1]} : vector<10x50xf32> to vector<10x1xf32>
    %cst_47 = arith.constant 0.000000e+00 : f32
    %358 = vector.shape_cast %357 : vector<10x1xf32> to vector<10x1xf32>
    %359 = vector.broadcast %358 : vector<10x1xf32> to vector<10x128xf32>
    %360 = vector.broadcast %cst_47 : f32 to vector<10x128xf32>
    %361 = arith.select %356, %359, %360 : vector<10x128xi1>, vector<10x128xf32>
    %362 = arith.addf %354, %361 : vector<10x128xf32>
    %c45_i32 = arith.constant 45 : i32
    %363 = vector.broadcast %c45_i32 : i32 to vector<10x128xi32>
    %364 = arith.cmpi eq, %0, %363 : vector<10x128xi32>
    %365 = vector.extract_strided_slice %1 {offsets = [0, 45], sizes = [10, 1], strides = [1, 1]} : vector<10x50xf32> to vector<10x1xf32>
    %cst_48 = arith.constant 0.000000e+00 : f32
    %366 = vector.shape_cast %365 : vector<10x1xf32> to vector<10x1xf32>
    %367 = vector.broadcast %366 : vector<10x1xf32> to vector<10x128xf32>
    %368 = vector.broadcast %cst_48 : f32 to vector<10x128xf32>
    %369 = arith.select %364, %367, %368 : vector<10x128xi1>, vector<10x128xf32>
    %370 = arith.addf %362, %369 : vector<10x128xf32>
    %c46_i32 = arith.constant 46 : i32
    %371 = vector.broadcast %c46_i32 : i32 to vector<10x128xi32>
    %372 = arith.cmpi eq, %0, %371 : vector<10x128xi32>
    %373 = vector.extract_strided_slice %1 {offsets = [0, 46], sizes = [10, 1], strides = [1, 1]} : vector<10x50xf32> to vector<10x1xf32>
    %cst_49 = arith.constant 0.000000e+00 : f32
    %374 = vector.shape_cast %373 : vector<10x1xf32> to vector<10x1xf32>
    %375 = vector.broadcast %374 : vector<10x1xf32> to vector<10x128xf32>
    %376 = vector.broadcast %cst_49 : f32 to vector<10x128xf32>
    %377 = arith.select %372, %375, %376 : vector<10x128xi1>, vector<10x128xf32>
    %378 = arith.addf %370, %377 : vector<10x128xf32>
    %c47_i32 = arith.constant 47 : i32
    %379 = vector.broadcast %c47_i32 : i32 to vector<10x128xi32>
    %380 = arith.cmpi eq, %0, %379 : vector<10x128xi32>
    %381 = vector.extract_strided_slice %1 {offsets = [0, 47], sizes = [10, 1], strides = [1, 1]} : vector<10x50xf32> to vector<10x1xf32>
    %cst_50 = arith.constant 0.000000e+00 : f32
    %382 = vector.shape_cast %381 : vector<10x1xf32> to vector<10x1xf32>
    %383 = vector.broadcast %382 : vector<10x1xf32> to vector<10x128xf32>
    %384 = vector.broadcast %cst_50 : f32 to vector<10x128xf32>
    %385 = arith.select %380, %383, %384 : vector<10x128xi1>, vector<10x128xf32>
    %386 = arith.addf %378, %385 : vector<10x128xf32>
    %c48_i32 = arith.constant 48 : i32
    %387 = vector.broadcast %c48_i32 : i32 to vector<10x128xi32>
    %388 = arith.cmpi eq, %0, %387 : vector<10x128xi32>
    %389 = vector.extract_strided_slice %1 {offsets = [0, 48], sizes = [10, 1], strides = [1, 1]} : vector<10x50xf32> to vector<10x1xf32>
    %cst_51 = arith.constant 0.000000e+00 : f32
    %390 = vector.shape_cast %389 : vector<10x1xf32> to vector<10x1xf32>
    %391 = vector.broadcast %390 : vector<10x1xf32> to vector<10x128xf32>
    %392 = vector.broadcast %cst_51 : f32 to vector<10x128xf32>
    %393 = arith.select %388, %391, %392 : vector<10x128xi1>, vector<10x128xf32>
    %394 = arith.addf %386, %393 : vector<10x128xf32>
    %c49_i32 = arith.constant 49 : i32
    %395 = vector.broadcast %c49_i32 : i32 to vector<10x128xi32>
    %396 = arith.cmpi eq, %0, %395 : vector<10x128xi32>
    %397 = vector.extract_strided_slice %1 {offsets = [0, 49], sizes = [10, 1], strides = [1, 1]} : vector<10x50xf32> to vector<10x1xf32>
    %cst_52 = arith.constant 0.000000e+00 : f32
    %398 = vector.shape_cast %397 : vector<10x1xf32> to vector<10x1xf32>
    %399 = vector.broadcast %398 : vector<10x1xf32> to vector<10x128xf32>
    %400 = vector.broadcast %cst_52 : f32 to vector<10x128xf32>
    %401 = arith.select %396, %399, %400 : vector<10x128xi1>, vector<10x128xf32>
    %402 = arith.addf %394, %401 : vector<10x128xf32>
    %cst_53 = arith.constant dense<0.000000e+00> : vector<128xf32>
    %403 = vector.multi_reduction <add>, %402, %cst_53 [0] : vector<10x128xf32> to vector<128xf32>
    %404 = vector.shape_cast %403 : vector<128xf32> to vector<1x128xf32>
    %c0_54 = arith.constant 0 : index
    %c0_55 = arith.constant 0 : index
    %405 = memref.load %arg3[%c0_54, %c0_55] : memref<1x1xf32, #tpu.memory_space<smem>>
    %406 = vector.broadcast %405 : f32 to vector<1x128xf32>
    %407 = arith.addf %404, %406 : vector<1x128xf32>
    %c0_56 = arith.constant 0 : index
    %c0_57 = arith.constant 0 : index
    %408 = vector.load %arg4[%c0_56, %c0_57] : memref<1x128xf32, #tpu.memory_space<vmem>>, vector<1x128xf32>
    tpu.vector_store %arg4[%c0_56, %c0_57], %407 {strides = array<i32>} : memref<1x128xf32, #tpu.memory_space<vmem>>, vector<1x128xf32>,
    return
  }
  func.func @transform_0(%arg0: i32) -> (i32, i32) {
    %c0_i32 = arith.constant 0 : i32
    %c0_i32_0 = arith.constant 0 : i32
    return %c0_i32, %arg0 : i32, i32
  }
  func.func @transform_1(%arg0: i32) -> (i32, i32) {
    %c0_i32 = arith.constant 0 : i32
    %c0_i32_0 = arith.constant 0 : i32
    %c0_i32_1 = arith.constant 0 : i32
    return %c0_i32, %c0_i32_0 : i32, i32
  }
  func.func @transform_2(%arg0: i32) -> (i32, i32) {
    %c0_i32 = arith.constant 0 : i32
    %c0_i32_0 = arith.constant 0 : i32
    %c0_i32_1 = arith.constant 0 : i32
    return %c0_i32, %c0_i32_0 : i32, i32
  }
  func.func @transform_3(%arg0: i32) -> (i32, i32) {
    %c0_i32 = arith.constant 0 : i32
    %c0_i32_0 = arith.constant 0 : i32
    return %c0_i32, %arg0 : i32, i32
  }
}

</mosaic_0001>

<llo_original>
// kernel: tpu_custom_call.1
$region0: #{tpu_custom_call.1}
  #allocation0 [shape = 'u32[]', space=smem, size = 0x4, offset = 0x4, fixed_abs, tag = 'smem constant byte address 0x4 - core index']
  #allocation1 [shape = 'u32[144,128]{1,0:T(1,128)}', space=vmem, size = 0x12000, scoped, tag = 'internal scratch']
  #allocation2 [shape = 'f32[1,1]{1,0:T(1,128)S(6)}', space=smem, size = 0x200, scoped, tag = 'scoped memory for tpu_custom_call.1']
  %s0 = inlined_call_operand.hbm [shape: s32[10,128], index: 0, kind: input, shape index: {}]
  %s1 = inlined_call_operand.hbm [shape: f32[10,50], index: 1, kind: input, shape index: {}]
  %s2 = inlined_call_operand.<no memory space> [shape: f32[1,1], index: 2, kind: input, shape index: {}]
  %s3 = inlined_call_operand.hbm [shape: f32[1,128], index: 3, kind: output, shape index: {}]
  %s4 = sld [smem:[#allocation0]]
  $region30: #{tpu_custom_call.1} parent=0
    _
  %s6 = ssub.s32 1, %s4
  %s7 = scalar_select 0, %s6, %s4
  %8 = sst [smem:[#allocation2]] %s2
  $region1: #{tpu_custom_call.1} parent=0
    #allocation3 [shape = 'u8[8192]{0}', space=vmem, size = 0x2000, scoped, tag = 'input window, operand 0, single buffered']
    #allocation4 [shape = 's32[1]{0}', space=sflag, size = 0x4, scoped, tag = 'scoped memory for tpu_custom_call.1']
    #allocation5 [shape = 's32[1]{0}', space=sflag, size = 0x4, scoped, tag = 'scoped memory for tpu_custom_call.1']
    #allocation6 [shape = 'u8[8192]{0}', space=vmem, size = 0x2000, scoped, tag = 'input window, operand 1, single buffered']
    #allocation7 [shape = 's32[1]{0}', space=sflag, size = 0x4, scoped, tag = 'scoped memory for tpu_custom_call.1']
    #allocation8 [shape = 'u8[512]{0}', space=vmem, size = 0x400, scoped, tag = 'output window, operand 0, single buffered']
    %9 = vsyncpa [#allocation4], 0
    %10 = vsyncpa [#allocation7], 0
    %11 = vsyncpa [#allocation5], 0
    // Predicated region
    $region2: #{tpu_custom_call.1} parent=1 // pred_check
      _
    $region3: #{tpu_custom_call.1} parent=1 // pred_check_branch
      %13 = sbr.rel (0) target = $region5
    $region4: #{tpu_custom_call.1} parent=1 // pred_region
      %s15 = ssub.s32 256, 256
      %16 = vsyncadd [#allocation4], %s15
      %s17 = sshll.u32 [#allocation3], 4
      %s18 = int_to_ptr.vmem [resolvable:$true] %s17
      %23 = dma.hbm_to_vmem [thread:$0]  %s0, 256, %s18, [#allocation4], 128, 128, 8
    $region5: #{tpu_custom_call.1} parent=1 // pred_fallthru
      _
    // Predicated region
    $region6: #{tpu_custom_call.1} parent=1 // pred_check
      _
    $region7: #{tpu_custom_call.1} parent=1 // pred_check_branch
      %25 = sbr.rel (0) target = $region9
    $region8: #{tpu_custom_call.1} parent=1 // pred_region
      %s27 = ssub.s32 256, 256
      %28 = vsyncadd [#allocation7], %s27
      %s29 = sshll.u32 [#allocation6], 4
      %s30 = int_to_ptr.vmem [resolvable:$true] %s29
      %35 = dma.hbm_to_vmem [thread:$0]  %s1, 256, %s30, [#allocation7], 128, 128, 8
    $region9: #{tpu_custom_call.1} parent=1 // pred_fallthru
      _
    // Predicated region
    $region10: #{tpu_custom_call.1} parent=1 // pred_check
      _
    $region11: #{tpu_custom_call.1} parent=1 // pred_check_branch
      %37 = sbr.rel (0) target = $region13
    $region12: #{tpu_custom_call.1} parent=1 // pred_region
      _
    $region13: #{tpu_custom_call.1} parent=1 // pred_fallthru
      _
    // Predicated region
    $region14: #{tpu_custom_call.1} parent=1 // pred_check
      _
    $region15: #{tpu_custom_call.1} parent=1 // pred_check_branch
      %39 = sbr.rel (0) target = $region17
    $region16: #{tpu_custom_call.1} parent=1 // pred_region
      %40 = dma.done [#allocation4], 256
    $region17: #{tpu_custom_call.1} parent=1 // pred_fallthru
      _
    // Predicated region
    $region18: #{tpu_custom_call.1} parent=1 // pred_check
      _
    $region19: #{tpu_custom_call.1} parent=1 // pred_check_branch
      %42 = sbr.rel (0) target = $region21
    $region20: #{tpu_custom_call.1} parent=1 // pred_region
      %43 = dma.done [#allocation7], 256
    $region21: #{tpu_custom_call.1} parent=1 // pred_fallthru
      _
    %v44 = vld [vmem:[#allocation3] sm:$0xff]
    %v45 = vld [vmem:[#allocation3 + $0x8] sm:$0x3]
    %v46 = vld [vmem:[#allocation6] sm:$0xff]
    %v47 = vld [vmem:[#allocation6 + $0x8] sm:$0x3]
    %vm48 = vcmp.eq.s32.totalorder %v44, 0
    %vm49 = vcmp.eq.s32.totalorder %v45, 0
    %51 = vset.pattern.permute.xlu0 0
    %52 = vperm.xlu0 %51, %v46
    %v53 = vpop.permute.xlu0 %52
    %56 = vset.pattern.permute.xlu0 0
    %57 = vperm.xlu0 %56, %v47
    %v58 = vpop.permute.xlu0 %57
    %v60 = vsel %vm48, %v53, 0.0
    %v61 = vsel %vm49, %v58, 0.0
    %v62 = vadd.f32 %v60, 0.0
    %v63 = vadd.f32 %v61, 0.0
    %vm64 = vcmp.eq.s32.totalorder %v44, 1
    %vm65 = vcmp.eq.s32.totalorder %v45, 1
    %66 = vset.pattern.permute.xlu0 1
    %67 = vperm.xlu0 %66, %v46
    %v68 = vpop.permute.xlu0 %67
    %70 = vset.pattern.permute.xlu0 1
    %71 = vperm.xlu0 %70, %v47
    %v72 = vpop.permute.xlu0 %71
    %v74 = vsel %vm64, %v68, 0.0
    %v75 = vsel %vm65, %v72, 0.0
    %v76 = vadd.f32 %v62, %v74
    %v77 = vadd.f32 %v63, %v75
    %vm78 = vcmp.eq.s32.totalorder %v44, 2
    %vm79 = vcmp.eq.s32.totalorder %v45, 2
    %80 = vset.pattern.permute.xlu0 2
    %81 = vperm.xlu0 %80, %v46
    %v82 = vpop.permute.xlu0 %81
    %84 = vset.pattern.permute.xlu0 2
    %85 = vperm.xlu0 %84, %v47
    %v86 = vpop.permute.xlu0 %85
    %v88 = vsel %vm78, %v82, 0.0
    %v89 = vsel %vm79, %v86, 0.0
    %v90 = vadd.f32 %v76, %v88
    %v91 = vadd.f32 %v77, %v89
    %vm92 = vcmp.eq.s32.totalorder %v44, 3
    %vm93 = vcmp.eq.s32.totalorder %v45, 3
    %94 = vset.pattern.permute.xlu0 3
    %95 = vperm.xlu0 %94, %v46
    %v96 = vpop.permute.xlu0 %95
    %98 = vset.pattern.permute.xlu0 3
    %99 = vperm.xlu0 %98, %v47
    %v100 = vpop.permute.xlu0 %99
    %v102 = vsel %vm92, %v96, 0.0
    %v103 = vsel %vm93, %v100, 0.0
    %v104 = vadd.f32 %v90, %v102
    %v105 = vadd.f32 %v91, %v103
    %vm106 = vcmp.eq.s32.totalorder %v44, 4
    %vm107 = vcmp.eq.s32.totalorder %v45, 4
    %108 = vset.pattern.permute.xlu0 4
    %109 = vperm.xlu0 %108, %v46
    %v110 = vpop.permute.xlu0 %109
    %112 = vset.pattern.permute.xlu0 4
    %113 = vperm.xlu0 %112, %v47
    %v114 = vpop.permute.xlu0 %113
    %v116 = vsel %vm106, %v110, 0.0
    %v117 = vsel %vm107, %v114, 0.0
    %v118 = vadd.f32 %v104, %v116
    %v119 = vadd.f32 %v105, %v117
    %vm120 = vcmp.eq.s32.totalorder %v44, 5
    %vm121 = vcmp.eq.s32.totalorder %v45, 5
    %122 = vset.pattern.permute.xlu0 5
    %123 = vperm.xlu0 %122, %v46
    %v124 = vpop.permute.xlu0 %123
    %126 = vset.pattern.permute.xlu0 5
    %127 = vperm.xlu0 %126, %v47
    %v128 = vpop.permute.xlu0 %127
    %v130 = vsel %vm120, %v124, 0.0
    %v131 = vsel %vm121, %v128, 0.0
    %v132 = vadd.f32 %v118, %v130
    %v133 = vadd.f32 %v119, %v131
    %vm134 = vcmp.eq.s32.totalorder %v44, 6
    %vm135 = vcmp.eq.s32.totalorder %v45, 6
    %136 = vset.pattern.permute.xlu0 6
    %137 = vperm.xlu0 %136, %v46
    %v138 = vpop.permute.xlu0 %137
    %140 = vset.pattern.permute.xlu0 6
    %141 = vperm.xlu0 %140, %v47
    %v142 = vpop.permute.xlu0 %141
    %v144 = vsel %vm134, %v138, 0.0
    %v145 = vsel %vm135, %v142, 0.0
    %v146 = vadd.f32 %v132, %v144
    %v147 = vadd.f32 %v133, %v145
    %vm148 = vcmp.eq.s32.totalorder %v44, 7
    %vm149 = vcmp.eq.s32.totalorder %v45, 7
    %150 = vset.pattern.permute.xlu0 7
    %151 = vperm.xlu0 %150, %v46
    %v152 = vpop.permute.xlu0 %151
    %154 = vset.pattern.permute.xlu0 7
    %155 = vperm.xlu0 %154, %v47
    %v156 = vpop.permute.xlu0 %155
    %v158 = vsel %vm148, %v152, 0.0
    %v159 = vsel %vm149, %v156, 0.0
    %v160 = vadd.f32 %v146, %v158
    %v161 = vadd.f32 %v147, %v159
    %vm162 = vcmp.eq.s32.totalorder %v44, 8
    %vm163 = vcmp.eq.s32.totalorder %v45, 8
    %164 = vset.pattern.permute.xlu0 8
    %165 = vperm.xlu0 %164, %v46
    %v166 = vpop.permute.xlu0 %165
    %168 = vset.pattern.permute.xlu0 8
    %169 = vperm.xlu0 %168, %v47
    %v170 = vpop.permute.xlu0 %169
    %v172 = vsel %vm162, %v166, 0.0
    %v173 = vsel %vm163, %v170, 0.0
    %v174 = vadd.f32 %v160, %v172
    %v175 = vadd.f32 %v161, %v173
    %vm176 = vcmp.eq.s32.totalorder %v44, 9
    %vm177 = vcmp.eq.s32.totalorder %v45, 9
    %178 = vset.pattern.permute.xlu0 9
    %179 = vperm.xlu0 %178, %v46
    %v180 = vpop.permute.xlu0 %179
    %182 = vset.pattern.permute.xlu0 9
    %183 = vperm.xlu0 %182, %v47
    %v184 = vpop.permute.xlu0 %183
    %v186 = vsel %vm176, %v180, 0.0
    %v187 = vsel %vm177, %v184, 0.0
    %v188 = vadd.f32 %v174, %v186
    %v189 = vadd.f32 %v175, %v187
    %vm190 = vcmp.eq.s32.totalorder %v44, 10
    %vm191 = vcmp.eq.s32.totalorder %v45, 10
    %192 = vset.pattern.permute.xlu0 10
    %193 = vperm.xlu0 %192, %v46
    %v194 = vpop.permute.xlu0 %193
    %196 = vset.pattern.permute.xlu0 10
    %197 = vperm.xlu0 %196, %v47
    %v198 = vpop.permute.xlu0 %197
    %v200 = vsel %vm190, %v194, 0.0
    %v201 = vsel %vm191, %v198, 0.0
    %v202 = vadd.f32 %v188, %v200
    %v203 = vadd.f32 %v189, %v201
    %vm204 = vcmp.eq.s32.totalorder %v44, 11
    %vm205 = vcmp.eq.s32.totalorder %v45, 11
    %206 = vset.pattern.permute.xlu0 11
    %207 = vperm.xlu0 %206, %v46
    %v208 = vpop.permute.xlu0 %207
    %210 = vset.pattern.permute.xlu0 11
    %211 = vperm.xlu0 %210, %v47
    %v212 = vpop.permute.xlu0 %211
    %v214 = vsel %vm204, %v208, 0.0
    %v215 = vsel %vm205, %v212, 0.0
    %v216 = vadd.f32 %v202, %v214
    %v217 = vadd.f32 %v203, %v215
    %vm218 = vcmp.eq.s32.totalorder %v44, 12
    %vm219 = vcmp.eq.s32.totalorder %v45, 12
    %220 = vset.pattern.permute.xlu0 12
    %221 = vperm.xlu0 %220, %v46
    %v222 = vpop.permute.xlu0 %221
    %224 = vset.pattern.permute.xlu0 12
    %225 = vperm.xlu0 %224, %v47
    %v226 = vpop.permute.xlu0 %225
    %v228 = vsel %vm218, %v222, 0.0
    %v229 = vsel %vm219, %v226, 0.0
    %v230 = vadd.f32 %v216, %v228
    %v231 = vadd.f32 %v217, %v229
    %vm232 = vcmp.eq.s32.totalorder %v44, 13
    %vm233 = vcmp.eq.s32.totalorder %v45, 13
    %234 = vset.pattern.permute.xlu0 13
    %235 = vperm.xlu0 %234, %v46
    %v236 = vpop.permute.xlu0 %235
    %238 = vset.pattern.permute.xlu0 13
    %239 = vperm.xlu0 %238, %v47
    %v240 = vpop.permute.xlu0 %239
    %v242 = vsel %vm232, %v236, 0.0
    %v243 = vsel %vm233, %v240, 0.0
    %v244 = vadd.f32 %v230, %v242
    %v245 = vadd.f32 %v231, %v243
    %vm246 = vcmp.eq.s32.totalorder %v44, 14
    %vm247 = vcmp.eq.s32.totalorder %v45, 14
    %248 = vset.pattern.permute.xlu0 14
    %249 = vperm.xlu0 %248, %v46
    %v250 = vpop.permute.xlu0 %249
    %252 = vset.pattern.permute.xlu0 14
    %253 = vperm.xlu0 %252, %v47
    %v254 = vpop.permute.xlu0 %253
    %v256 = vsel %vm246, %v250, 0.0
    %v257 = vsel %vm247, %v254, 0.0
    %v258 = vadd.f32 %v244, %v256
    %v259 = vadd.f32 %v245, %v257
    %vm260 = vcmp.eq.s32.totalorder %v44, 15
    %vm261 = vcmp.eq.s32.totalorder %v45, 15
    %262 = vset.pattern.permute.xlu0 15
    %263 = vperm.xlu0 %262, %v46
    %v264 = vpop.permute.xlu0 %263
    %266 = vset.pattern.permute.xlu0 15
    %267 = vperm.xlu0 %266, %v47
    %v268 = vpop.permute.xlu0 %267
    %v270 = vsel %vm260, %v264, 0.0
    %v271 = vsel %vm261, %v268, 0.0
    %v272 = vadd.f32 %v258, %v270
    %v273 = vadd.f32 %v259, %v271
    %vm274 = vcmp.eq.s32.totalorder %v44, 16
    %vm275 = vcmp.eq.s32.totalorder %v45, 16
    %276 = vset.pattern.permute.xlu0 16
    %277 = vperm.xlu0 %276, %v46
    %v278 = vpop.permute.xlu0 %277
    %280 = vset.pattern.permute.xlu0 16
    %281 = vperm.xlu0 %280, %v47
    %v282 = vpop.permute.xlu0 %281
    %v284 = vsel %vm274, %v278, 0.0
    %v285 = vsel %vm275, %v282, 0.0
    %v286 = vadd.f32 %v272, %v284
    %v287 = vadd.f32 %v273, %v285
    %vm288 = vcmp.eq.s32.totalorder %v44, 17
    %vm289 = vcmp.eq.s32.totalorder %v45, 17
    %290 = vset.pattern.permute.xlu0 17
    %291 = vperm.xlu0 %290, %v46
    %v292 = vpop.permute.xlu0 %291
    %294 = vset.pattern.permute.xlu0 17
    %295 = vperm.xlu0 %294, %v47
    %v296 = vpop.permute.xlu0 %295
    %v298 = vsel %vm288, %v292, 0.0
    %v299 = vsel %vm289, %v296, 0.0
    %v300 = vadd.f32 %v286, %v298
    %v301 = vadd.f32 %v287, %v299
    %vm302 = vcmp.eq.s32.totalorder %v44, 18
    %vm303 = vcmp.eq.s32.totalorder %v45, 18
    %304 = vset.pattern.permute.xlu0 18
    %305 = vperm.xlu0 %304, %v46
    %v306 = vpop.permute.xlu0 %305
    %308 = vset.pattern.permute.xlu0 18
    %309 = vperm.xlu0 %308, %v47
    %v310 = vpop.permute.xlu0 %309
    %v312 = vsel %vm302, %v306, 0.0
    %v313 = vsel %vm303, %v310, 0.0
    %v314 = vadd.f32 %v300, %v312
    %v315 = vadd.f32 %v301, %v313
    %vm316 = vcmp.eq.s32.totalorder %v44, 19
    %vm317 = vcmp.eq.s32.totalorder %v45, 19
    %318 = vset.pattern.permute.xlu0 19
    %319 = vperm.xlu0 %318, %v46
    %v320 = vpop.permute.xlu0 %319
    %322 = vset.pattern.permute.xlu0 19
    %323 = vperm.xlu0 %322, %v47
    %v324 = vpop.permute.xlu0 %323
    %v326 = vsel %vm316, %v320, 0.0
    %v327 = vsel %vm317, %v324, 0.0
    %v328 = vadd.f32 %v314, %v326
    %v329 = vadd.f32 %v315, %v327
    %vm330 = vcmp.eq.s32.totalorder %v44, 20
    %vm331 = vcmp.eq.s32.totalorder %v45, 20
    %332 = vset.pattern.permute.xlu0 20
    %333 = vperm.xlu0 %332, %v46
    %v334 = vpop.permute.xlu0 %333
    %336 = vset.pattern.permute.xlu0 20
    %337 = vperm.xlu0 %336, %v47
    %v338 = vpop.permute.xlu0 %337
    %v340 = vsel %vm330, %v334, 0.0
    %v341 = vsel %vm331, %v338, 0.0
    %v342 = vadd.f32 %v328, %v340
    %v343 = vadd.f32 %v329, %v341
    %vm344 = vcmp.eq.s32.totalorder %v44, 21
    %vm345 = vcmp.eq.s32.totalorder %v45, 21
    %346 = vset.pattern.permute.xlu0 21
    %347 = vperm.xlu0 %346, %v46
    %v348 = vpop.permute.xlu0 %347
    %350 = vset.pattern.permute.xlu0 21
    %351 = vperm.xlu0 %350, %v47
    %v352 = vpop.permute.xlu0 %351
    %v354 = vsel %vm344, %v348, 0.0
    %v355 = vsel %vm345, %v352, 0.0
    %v356 = vadd.f32 %v342, %v354
    %v357 = vadd.f32 %v343, %v355
    %vm358 = vcmp.eq.s32.totalorder %v44, 22
    %vm359 = vcmp.eq.s32.totalorder %v45, 22
    %360 = vset.pattern.permute.xlu0 22
    %361 = vperm.xlu0 %360, %v46
    %v362 = vpop.permute.xlu0 %361
    %364 = vset.pattern.permute.xlu0 22
    %365 = vperm.xlu0 %364, %v47
    %v366 = vpop.permute.xlu0 %365
    %v368 = vsel %vm358, %v362, 0.0
    %v369 = vsel %vm359, %v366, 0.0
    %v370 = vadd.f32 %v356, %v368
    %v371 = vadd.f32 %v357, %v369
    %vm372 = vcmp.eq.s32.totalorder %v44, 23
    %vm373 = vcmp.eq.s32.totalorder %v45, 23
    %374 = vset.pattern.permute.xlu0 23
    %375 = vperm.xlu0 %374, %v46
    %v376 = vpop.permute.xlu0 %375
    %378 = vset.pattern.permute.xlu0 23
    %379 = vperm.xlu0 %378, %v47
    %v380 = vpop.permute.xlu0 %379
    %v382 = vsel %vm372, %v376, 0.0
    %v383 = vsel %vm373, %v380, 0.0
    %v384 = vadd.f32 %v370, %v382
    %v385 = vadd.f32 %v371, %v383
    %vm386 = vcmp.eq.s32.totalorder %v44, 24
    %vm387 = vcmp.eq.s32.totalorder %v45, 24
    %388 = vset.pattern.permute.xlu0 24
    %389 = vperm.xlu0 %388, %v46
    %v390 = vpop.permute.xlu0 %389
    %392 = vset.pattern.permute.xlu0 24
    %393 = vperm.xlu0 %392, %v47
    %v394 = vpop.permute.xlu0 %393
    %v396 = vsel %vm386, %v390, 0.0
    %v397 = vsel %vm387, %v394, 0.0
    %v398 = vadd.f32 %v384, %v396
    %v399 = vadd.f32 %v385, %v397
    %vm400 = vcmp.eq.s32.totalorder %v44, 25
    %vm401 = vcmp.eq.s32.totalorder %v45, 25
    %402 = vset.pattern.permute.xlu0 25
    %403 = vperm.xlu0 %402, %v46
    %v404 = vpop.permute.xlu0 %403
    %406 = vset.pattern.permute.xlu0 25
    %407 = vperm.xlu0 %406, %v47
    %v408 = vpop.permute.xlu0 %407
    %v410 = vsel %vm400, %v404, 0.0
    %v411 = vsel %vm401, %v408, 0.0
    %v412 = vadd.f32 %v398, %v410
    %v413 = vadd.f32 %v399, %v411
    %vm414 = vcmp.eq.s32.totalorder %v44, 26
    %vm415 = vcmp.eq.s32.totalorder %v45, 26
    %416 = vset.pattern.permute.xlu0 26
    %417 = vperm.xlu0 %416, %v46
    %v418 = vpop.permute.xlu0 %417
    %420 = vset.pattern.permute.xlu0 26
    %421 = vperm.xlu0 %420, %v47
    %v422 = vpop.permute.xlu0 %421
    %v424 = vsel %vm414, %v418, 0.0
    %v425 = vsel %vm415, %v422, 0.0
    %v426 = vadd.f32 %v412, %v424
    %v427 = vadd.f32 %v413, %v425
    %vm428 = vcmp.eq.s32.totalorder %v44, 27
    %vm429 = vcmp.eq.s32.totalorder %v45, 27
    %430 = vset.pattern.permute.xlu0 27
    %431 = vperm.xlu0 %430, %v46
    %v432 = vpop.permute.xlu0 %431
    %434 = vset.pattern.permute.xlu0 27
    %435 = vperm.xlu0 %434, %v47
    %v436 = vpop.permute.xlu0 %435
    %v438 = vsel %vm428, %v432, 0.0
    %v439 = vsel %vm429, %v436, 0.0
    %v440 = vadd.f32 %v426, %v438
    %v441 = vadd.f32 %v427, %v439
    %vm442 = vcmp.eq.s32.totalorder %v44, 28
    %vm443 = vcmp.eq.s32.totalorder %v45, 28
    %444 = vset.pattern.permute.xlu0 28
    %445 = vperm.xlu0 %444, %v46
    %v446 = vpop.permute.xlu0 %445
    %448 = vset.pattern.permute.xlu0 28
    %449 = vperm.xlu0 %448, %v47
    %v450 = vpop.permute.xlu0 %449
    %v452 = vsel %vm442, %v446, 0.0
    %v453 = vsel %vm443, %v450, 0.0
    %v454 = vadd.f32 %v440, %v452
    %v455 = vadd.f32 %v441, %v453
    %vm456 = vcmp.eq.s32.totalorder %v44, 29
    %vm457 = vcmp.eq.s32.totalorder %v45, 29
    %458 = vset.pattern.permute.xlu0 29
    %459 = vperm.xlu0 %458, %v46
    %v460 = vpop.permute.xlu0 %459
    %462 = vset.pattern.permute.xlu0 29
    %463 = vperm.xlu0 %462, %v47
    %v464 = vpop.permute.xlu0 %463
    %v466 = vsel %vm456, %v460, 0.0
    %v467 = vsel %vm457, %v464, 0.0
    %v468 = vadd.f32 %v454, %v466
    %v469 = vadd.f32 %v455, %v467
    %vm470 = vcmp.eq.s32.totalorder %v44, 30
    %vm471 = vcmp.eq.s32.totalorder %v45, 30
    %472 = vset.pattern.permute.xlu0 30
    %473 = vperm.xlu0 %472, %v46
    %v474 = vpop.permute.xlu0 %473
    %476 = vset.pattern.permute.xlu0 30
    %477 = vperm.xlu0 %476, %v47
    %v478 = vpop.permute.xlu0 %477
    %v480 = vsel %vm470, %v474, 0.0
    %v481 = vsel %vm471, %v478, 0.0
    %v482 = vadd.f32 %v468, %v480
    %v483 = vadd.f32 %v469, %v481
    %vm484 = vcmp.eq.s32.totalorder %v44, 31
    %vm485 = vcmp.eq.s32.totalorder %v45, 31
    %486 = vset.pattern.permute.xlu0 31
    %487 = vperm.xlu0 %486, %v46
    %v488 = vpop.permute.xlu0 %487
    %490 = vset.pattern.permute.xlu0 31
    %491 = vperm.xlu0 %490, %v47
    %v492 = vpop.permute.xlu0 %491
    %v494 = vsel %vm484, %v488, 0.0
    %v495 = vsel %vm485, %v492, 0.0
    %v496 = vadd.f32 %v482, %v494
    %v497 = vadd.f32 %v483, %v495
    %vm498 = vcmp.eq.s32.totalorder %v44, 32
    %vm499 = vcmp.eq.s32.totalorder %v45, 32
    %500 = vset.pattern.permute.xlu0 32
    %501 = vperm.xlu0 %500, %v46
    %v502 = vpop.permute.xlu0 %501
    %504 = vset.pattern.permute.xlu0 32
    %505 = vperm.xlu0 %504, %v47
    %v506 = vpop.permute.xlu0 %505
    %v508 = vsel %vm498, %v502, 0.0
    %v509 = vsel %vm499, %v506, 0.0
    %v510 = vadd.f32 %v496, %v508
    %v511 = vadd.f32 %v497, %v509
    %vm512 = vcmp.eq.s32.totalorder %v44, 33
    %vm513 = vcmp.eq.s32.totalorder %v45, 33
    %514 = vset.pattern.permute.xlu0 33
    %515 = vperm.xlu0 %514, %v46
    %v516 = vpop.permute.xlu0 %515
    %518 = vset.pattern.permute.xlu0 33
    %519 = vperm.xlu0 %518, %v47
    %v520 = vpop.permute.xlu0 %519
    %v522 = vsel %vm512, %v516, 0.0
    %v523 = vsel %vm513, %v520, 0.0
    %v524 = vadd.f32 %v510, %v522
    %v525 = vadd.f32 %v511, %v523
    %vm526 = vcmp.eq.s32.totalorder %v44, 34
    %vm527 = vcmp.eq.s32.totalorder %v45, 34
    %528 = vset.pattern.permute.xlu0 34
    %529 = vperm.xlu0 %528, %v46
    %v530 = vpop.permute.xlu0 %529
    %532 = vset.pattern.permute.xlu0 34
    %533 = vperm.xlu0 %532, %v47
    %v534 = vpop.permute.xlu0 %533
    %v536 = vsel %vm526, %v530, 0.0
    %v537 = vsel %vm527, %v534, 0.0
    %v538 = vadd.f32 %v524, %v536
    %v539 = vadd.f32 %v525, %v537
    %vm540 = vcmp.eq.s32.totalorder %v44, 35
    %vm541 = vcmp.eq.s32.totalorder %v45, 35
    %542 = vset.pattern.permute.xlu0 35
    %543 = vperm.xlu0 %542, %v46
    %v544 = vpop.permute.xlu0 %543
    %546 = vset.pattern.permute.xlu0 35
    %547 = vperm.xlu0 %546, %v47
    %v548 = vpop.permute.xlu0 %547
    %v550 = vsel %vm540, %v544, 0.0
    %v551 = vsel %vm541, %v548, 0.0
    %v552 = vadd.f32 %v538, %v550
    %v553 = vadd.f32 %v539, %v551
    %vm554 = vcmp.eq.s32.totalorder %v44, 36
    %vm555 = vcmp.eq.s32.totalorder %v45, 36
    %556 = vset.pattern.permute.xlu0 36
    %557 = vperm.xlu0 %556, %v46
    %v558 = vpop.permute.xlu0 %557
    %560 = vset.pattern.permute.xlu0 36
    %561 = vperm.xlu0 %560, %v47
    %v562 = vpop.permute.xlu0 %561
    %v564 = vsel %vm554, %v558, 0.0
    %v565 = vsel %vm555, %v562, 0.0
    %v566 = vadd.f32 %v552, %v564
    %v567 = vadd.f32 %v553, %v565
    %vm568 = vcmp.eq.s32.totalorder %v44, 37
    %vm569 = vcmp.eq.s32.totalorder %v45, 37
    %570 = vset.pattern.permute.xlu0 37
    %571 = vperm.xlu0 %570, %v46
    %v572 = vpop.permute.xlu0 %571
    %574 = vset.pattern.permute.xlu0 37
    %575 = vperm.xlu0 %574, %v47
    %v576 = vpop.permute.xlu0 %575
    %v578 = vsel %vm568, %v572, 0.0
    %v579 = vsel %vm569, %v576, 0.0
    %v580 = vadd.f32 %v566, %v578
    %v581 = vadd.f32 %v567, %v579
    %vm582 = vcmp.eq.s32.totalorder %v44, 38
    %vm583 = vcmp.eq.s32.totalorder %v45, 38
    %584 = vset.pattern.permute.xlu0 38
    %585 = vperm.xlu0 %584, %v46
    %v586 = vpop.permute.xlu0 %585
    %588 = vset.pattern.permute.xlu0 38
    %589 = vperm.xlu0 %588, %v47
    %v590 = vpop.permute.xlu0 %589
    %v592 = vsel %vm582, %v586, 0.0
    %v593 = vsel %vm583, %v590, 0.0
    %v594 = vadd.f32 %v580, %v592
    %v595 = vadd.f32 %v581, %v593
    %vm596 = vcmp.eq.s32.totalorder %v44, 39
    %vm597 = vcmp.eq.s32.totalorder %v45, 39
    %598 = vset.pattern.permute.xlu0 39
    %599 = vperm.xlu0 %598, %v46
    %v600 = vpop.permute.xlu0 %599
    %602 = vset.pattern.permute.xlu0 39
    %603 = vperm.xlu0 %602, %v47
    %v604 = vpop.permute.xlu0 %603
    %v606 = vsel %vm596, %v600, 0.0
    %v607 = vsel %vm597, %v604, 0.0
    %v608 = vadd.f32 %v594, %v606
    %v609 = vadd.f32 %v595, %v607
    %vm610 = vcmp.eq.s32.totalorder %v44, 40
    %vm611 = vcmp.eq.s32.totalorder %v45, 40
    %612 = vset.pattern.permute.xlu0 40
    %613 = vperm.xlu0 %612, %v46
    %v614 = vpop.permute.xlu0 %613
    %616 = vset.pattern.permute.xlu0 40
    %617 = vperm.xlu0 %616, %v47
    %v618 = vpop.permute.xlu0 %617
    %v620 = vsel %vm610, %v614, 0.0
    %v621 = vsel %vm611, %v618, 0.0
    %v622 = vadd.f32 %v608, %v620
    %v623 = vadd.f32 %v609, %v621
    %vm624 = vcmp.eq.s32.totalorder %v44, 41
    %vm625 = vcmp.eq.s32.totalorder %v45, 41
    %626 = vset.pattern.permute.xlu0 41
    %627 = vperm.xlu0 %626, %v46
    %v628 = vpop.permute.xlu0 %627
    %630 = vset.pattern.permute.xlu0 41
    %631 = vperm.xlu0 %630, %v47
    %v632 = vpop.permute.xlu0 %631
    %v634 = vsel %vm624, %v628, 0.0
    %v635 = vsel %vm625, %v632, 0.0
    %v636 = vadd.f32 %v622, %v634
    %v637 = vadd.f32 %v623, %v635
    %vm638 = vcmp.eq.s32.totalorder %v44, 42
    %vm639 = vcmp.eq.s32.totalorder %v45, 42
    %640 = vset.pattern.permute.xlu0 42
    %641 = vperm.xlu0 %640, %v46
    %v642 = vpop.permute.xlu0 %641
    %644 = vset.pattern.permute.xlu0 42
    %645 = vperm.xlu0 %644, %v47
    %v646 = vpop.permute.xlu0 %645
    %v648 = vsel %vm638, %v642, 0.0
    %v649 = vsel %vm639, %v646, 0.0
    %v650 = vadd.f32 %v636, %v648
    %v651 = vadd.f32 %v637, %v649
    %vm652 = vcmp.eq.s32.totalorder %v44, 43
    %vm653 = vcmp.eq.s32.totalorder %v45, 43
    %654 = vset.pattern.permute.xlu0 43
    %655 = vperm.xlu0 %654, %v46
    %v656 = vpop.permute.xlu0 %655
    %658 = vset.pattern.permute.xlu0 43
    %659 = vperm.xlu0 %658, %v47
    %v660 = vpop.permute.xlu0 %659
    %v662 = vsel %vm652, %v656, 0.0
    %v663 = vsel %vm653, %v660, 0.0
    %v664 = vadd.f32 %v650, %v662
    %v665 = vadd.f32 %v651, %v663
    %vm666 = vcmp.eq.s32.totalorder %v44, 44
    %vm667 = vcmp.eq.s32.totalorder %v45, 44
    %668 = vset.pattern.permute.xlu0 44
    %669 = vperm.xlu0 %668, %v46
    %v670 = vpop.permute.xlu0 %669
    %672 = vset.pattern.permute.xlu0 44
    %673 = vperm.xlu0 %672, %v47
    %v674 = vpop.permute.xlu0 %673
    %v676 = vsel %vm666, %v670, 0.0
    %v677 = vsel %vm667, %v674, 0.0
    %v678 = vadd.f32 %v664, %v676
    %v679 = vadd.f32 %v665, %v677
    %vm680 = vcmp.eq.s32.totalorder %v44, 45
    %vm681 = vcmp.eq.s32.totalorder %v45, 45
    %682 = vset.pattern.permute.xlu0 45
    %683 = vperm.xlu0 %682, %v46
    %v684 = vpop.permute.xlu0 %683
    %686 = vset.pattern.permute.xlu0 45
    %687 = vperm.xlu0 %686, %v47
    %v688 = vpop.permute.xlu0 %687
    %v690 = vsel %vm680, %v684, 0.0
    %v691 = vsel %vm681, %v688, 0.0
    %v692 = vadd.f32 %v678, %v690
    %v693 = vadd.f32 %v679, %v691
    %vm694 = vcmp.eq.s32.totalorder %v44, 46
    %vm695 = vcmp.eq.s32.totalorder %v45, 46
    %696 = vset.pattern.permute.xlu0 46
    %697 = vperm.xlu0 %696, %v46
    %v698 = vpop.permute.xlu0 %697
    %700 = vset.pattern.permute.xlu0 46
    %701 = vperm.xlu0 %700, %v47
    %v702 = vpop.permute.xlu0 %701
    %v704 = vsel %vm694, %v698, 0.0
    %v705 = vsel %vm695, %v702, 0.0
    %v706 = vadd.f32 %v692, %v704
    %v707 = vadd.f32 %v693, %v705
    %vm708 = vcmp.eq.s32.totalorder %v44, 47
    %vm709 = vcmp.eq.s32.totalorder %v45, 47
    %710 = vset.pattern.permute.xlu0 47
    %711 = vperm.xlu0 %710, %v46
    %v712 = vpop.permute.xlu0 %711
    %714 = vset.pattern.permute.xlu0 47
    %715 = vperm.xlu0 %714, %v47
    %v716 = vpop.permute.xlu0 %715
    %v718 = vsel %vm708, %v712, 0.0
    %v719 = vsel %vm709, %v716, 0.0
    %v720 = vadd.f32 %v706, %v718
    %v721 = vadd.f32 %v707, %v719
    %vm722 = vcmp.eq.s32.totalorder %v44, 48
    %vm723 = vcmp.eq.s32.totalorder %v45, 48
    %724 = vset.pattern.permute.xlu0 48
    %725 = vperm.xlu0 %724, %v46
    %v726 = vpop.permute.xlu0 %725
    %728 = vset.pattern.permute.xlu0 48
    %729 = vperm.xlu0 %728, %v47
    %v730 = vpop.permute.xlu0 %729
    %v732 = vsel %vm722, %v726, 0.0
    %v733 = vsel %vm723, %v730, 0.0
    %v734 = vadd.f32 %v720, %v732
    %v735 = vadd.f32 %v721, %v733
    %vm736 = vcmp.eq.s32.totalorder %v44, 49
    %vm737 = vcmp.eq.s32.totalorder %v45, 49
    %738 = vset.pattern.permute.xlu0 49
    %739 = vperm.xlu0 %738, %v46
    %v740 = vpop.permute.xlu0 %739
    %742 = vset.pattern.permute.xlu0 49
    %743 = vperm.xlu0 %742, %v47
    %v744 = vpop.permute.xlu0 %743
    %v746 = vsel %vm736, %v740, 0.0
    %v747 = vsel %vm737, %v744, 0.0
    %v748 = vadd.f32 %v734, %v746
    %v749 = vadd.f32 %v735, %v747
    %vm750 = vcmask 1041408
    %v751 = vsel %vm750, %v749, 0.0
    %v752 = vadd.f32 %v748, %v751
    %v753 = vrot.slane %v752, 4
    %v754 = vadd.f32 %v752, %v753
    %v755 = vrot.slane %v754, 2
    %v756 = vadd.f32 %v754, %v755
    %v757 = vrot.slane %v756, 1
    %v758 = vadd.f32 %v756, %v757
    %s759 = sld [smem:[#allocation2]]
    %v760 = vstv %s759
    %v761 = vadd.f32 %v758, %v760
    %762 = vst [vmem:[#allocation8] sm:$0x1] %v761
    // Predicated region
    $region22: #{tpu_custom_call.1} parent=1 // pred_check
      _
    $region23: #{tpu_custom_call.1} parent=1 // pred_check_branch
      %764 = sbr.rel (0) target = $region25
    $region24: #{tpu_custom_call.1} parent=1 // pred_region
      %s766 = ssub.s32 16, 16
      %767 = vsyncadd [#allocation5], %s766
      %s769 = sshll.u32 [#allocation8], 4
      %s770 = int_to_ptr.vmem [resolvable:$true] %s769
      %772 = dma.vmem_to_hbm [thread:$0]  %s770, 16, %s3, [#allocation5]
    $region25: #{tpu_custom_call.1} parent=1 // pred_fallthru
      _
    // Predicated region
    $region26: #{tpu_custom_call.1} parent=1 // pred_check
      _
    $region27: #{tpu_custom_call.1} parent=1 // pred_check_branch
      %774 = sbr.rel (0) target = $region29
    $region28: #{tpu_custom_call.1} parent=1 // pred_region
      %775 = dma.done [#allocation5], 16
    $region29: #{tpu_custom_call.1} parent=1 // pred_fallthru
      _
    %776 = vsyncpa [#allocation4], 1
    %777 = vsyncpa [#allocation7], 1
    %778 = vsyncpa [#allocation5], 1

</llo_original>
